<compile_context>
chip_gen: v7x
topology: tpu7x:2x2x1
jax: 0.10.0
libtpu: 0.0.40
codegen_flags: <defaults>
</compile_context>

<pallas_src>
import functools

import jax
import jax.numpy as jnp
from jax.experimental import pallas as pl
from jax.experimental.pallas import tpu as pltpu

LAMBDA_REG = 0.001
LANES = 128
SUBLANES = 8
L2_TILE_ROWS = 512          # 512 x 128 f32 = 256 KiB per param tile


def _round_up(x, m):
    return ((x + m - 1) // m) * m


def _loss_kernel(out_ref, lab_ref, par_ref, loss_ref, acc_ref, *,
                 n_valid, inv_n, lambda_reg):
    i = pl.program_id(0)

    # ---- L2 accumulation: runs every grid step, VPU-only inner loop ----
    @pl.when(i == 0)
    def _init():
        acc_ref[...] = jnp.zeros_like(acc_ref)

    p = par_ref[...]                      # (tile_rows, 128) f32 tile
    acc_ref[...] += p * p                 # zero padding contributes 0

    # ---- Finalize on the last grid step ----
    @pl.when(i == pl.num_programs(0) - 1)
    def _finalize():
        # BCE-like term: mean(1 / (1 + exp(z))) == mean(sigmoid(-z)),
        # computed as 0.5*(1 - tanh(z/2)) so the transcendental runs on the
        # EUP instead of a VALU divide, with full f32 precision.
        z = out_ref[...] * lab_ref[...]                 # (RB, 128) lane-dense
        s = 0.5 * (1.0 - jnp.tanh(0.5 * z))
        rows, cols = z.shape
        flat_idx = (jax.lax.broadcasted_iota(jnp.int32, (rows, cols), 0) * cols
                    + jax.lax.broadcasted_iota(jnp.int32, (rows, cols), 1))
        s = jnp.where(flat_idx < n_valid, s, 0.0)       # mask padded tail
        mean_loss = jnp.sum(s) * inv_n                  # mean folded into 1/n mul

        l2 = jnp.sum(acc_ref[...])                      # single XLU reduce
        loss_ref[0, 0] = mean_loss + 0.5 * lambda_reg * l2


def bce_loss_with_l2(outputs, labels, params, lambda_reg=LAMBDA_REG):
    """outputs: (B, 1) float, labels: (B,) float, params: list of arrays."""
    outputs = outputs.astype(jnp.float32)
    # torch.unsqueeze(labels, 1) then broadcast against outputs
    labels2 = jnp.broadcast_to(labels.astype(jnp.float32)[:, None], outputs.shape)

    # ---- lane-dense BCE operands: flatten + pad to (RB, 128), RB % 8 == 0 ----
    n = outputs.size
    rb = max(SUBLANES, _round_up(pl.cdiv(n, LANES), SUBLANES))
    pad_bce = rb * LANES - n
    out2 = jnp.pad(outputs.reshape(-1), (0, pad_bce)).reshape(rb, LANES)
    lab2 = jnp.pad(labels2.reshape(-1), (0, pad_bce)).reshape(rb, LANES)

    # ---- flatten params into one lane-dense slab, tiled over the grid ----
    # TODO(synk): for very large models keep params in HBM (memory_space=pl.ANY,
    # per-tensor manual DMA, optional 2-TC split on v7x) instead of this
    # concatenated f32 copy in the wrapper.
    flat = jnp.concatenate([p.reshape(-1).astype(jnp.float32) for p in params])
    n_param = flat.shape[0]
    rows_needed = max(SUBLANES, _round_up(pl.cdiv(n_param, LANES), SUBLANES))
    tile_rows = min(L2_TILE_ROWS, rows_needed)
    total_rows = _round_up(rows_needed, tile_rows)
    flat = jnp.pad(flat, (0, total_rows * LANES - n_param)).reshape(
        total_rows, LANES)
    num_tiles = total_rows // tile_rows

    kernel = functools.partial(
        _loss_kernel, n_valid=n, inv_n=1.0 / float(n),
        lambda_reg=float(lambda_reg))

    loss = pl.pallas_call(
        kernel,
        out_shape=jax.ShapeDtypeStruct((1, 1), jnp.float32),
        grid_spec=pltpu.PrefetchScalarGridSpec(
            num_scalar_prefetch=0,
            grid=(num_tiles,),
            in_specs=[
                pl.BlockSpec((rb, LANES), lambda i: (0, 0)),         # outputs (resident)
                pl.BlockSpec((rb, LANES), lambda i: (0, 0)),         # labels  (resident)
                pl.BlockSpec((tile_rows, LANES), lambda i: (i, 0)),  # param tiles
            ],
            out_specs=pl.BlockSpec(
                (1, 1), lambda i: (0, 0),
                memory_space=pltpu.MemorySpace.SMEM),
            scratch_shapes=[pltpu.VMEM((tile_rows, LANES), jnp.float32)],
        ),
        compiler_params=pltpu.CompilerParams(
            dimension_semantics=("arbitrary",),          # reduction axis
            vmem_limit_bytes=32 * 1024 * 1024,
        ),
    )(out2, lab2, flat)
    return loss[0, 0]


def _reference(outputs, labels, params, lambda_reg=LAMBDA_REG):
    labels2 = labels.astype(jnp.float32)[:, None]
    loss = jnp.mean(1.0 / (1.0 + jnp.exp(outputs.astype(jnp.float32) * labels2)))
    l2 = sum(jnp.sum(p.astype(jnp.float32) ** 2) for p in params)
    return loss + 0.5 * lambda_reg * l2


if __name__ == "__main__":
    key = jax.random.PRNGKey(0)
    k1, k2, k3, k4, k5, k6 = jax.random.split(key, 6)

    # Deterministic synthetic "model" parameters (small 2-layer MLP: 16 -> 32 -> 1).
    params = [
        jax.random.normal(k1, (32, 16), jnp.float32) * 0.1,  # W1
        jax.random.normal(k2, (32,), jnp.float32) * 0.1,     # b1
        jax.random.normal(k3, (1, 32), jnp.float32) * 0.1,   # W2
        jax.random.normal(k4, (1,), jnp.float32) * 0.1,      # b2
    ]

    B = 16
    outputs = jax.random.normal(k5, (B, 1), jnp.float32)                # model logits
    labels = jnp.where(jax.random.bernoulli(k6, 0.5, (B,)), 1.0, -1.0)  # +/-1 labels

    loss = bce_loss_with_l2(outputs, labels, params)
    loss = jax.block_until_ready(loss)

    ref = _reference(outputs, labels, params)
    assert jnp.allclose(loss, ref, atol=1e-5, rtol=1e-5), (loss, ref)

    print("KERNEL_OK")
</pallas_src>

<mosaic_0001>
module attributes {stable_mosaic.version = 11 : i64} {
  func.func @_loss_kernel(%arg0: i32, %arg1: memref<8x128xf32, #tpu.memory_space<vmem>>, %arg2: memref<8x128xf32, #tpu.memory_space<vmem>>, %arg3: memref<8x128xf32, #tpu.memory_space<vmem>>, %arg4: memref<1x1xf32, #tpu.memory_space<smem>>, %arg5: memref<8x128xf32, #tpu.memory_space<vmem>>) attributes {dimension_semantics = [#tpu.dimension_semantics<arbitrary>], iteration_bounds = array<i64: 1>, scalar_prefetch = 0 : i64, scratch_operands = 1 : i64, tpu.core_type = #tpu.core_type<tc>, window_params = [{pipeline_mode = #tpu.pipeline_mode<synchronous>, transform_indices = @transform_0, window_bounds = array<i64: 8, 128>}, {pipeline_mode = #tpu.pipeline_mode<synchronous>, transform_indices = @transform_1, window_bounds = array<i64: 8, 128>}, {transform_indices = @transform_2, window_bounds = array<i64: 8, 128>}, {transform_indices = @transform_3, window_bounds = array<i64: 1, 1>}]} {
    %c0_i32 = arith.constant 0 : i32
    %0 = arith.cmpi eq, %arg0, %c0_i32 : i32
    %1 = arith.extui %0 : i1 to i32
    %c0_i32_0 = arith.constant 0 : i32
    %2 = arith.cmpi ne, %1, %c0_i32_0 : i32
    scf.if %2 {
      %cst = arith.constant 0.000000e+00 : f32
      %11 = vector.broadcast %cst : f32 to vector<8x128xf32>
      %c0_8 = arith.constant 0 : index
      %c0_9 = arith.constant 0 : index
      %12 = vector.load %arg5[%c0_8, %c0_9] : memref<8x128xf32, #tpu.memory_space<vmem>>, vector<8x128xf32>
      tpu.vector_store %arg5[%c0_8, %c0_9], %11 {strides = array<i32>} : memref<8x128xf32, #tpu.memory_space<vmem>>, vector<8x128xf32>,
    } else {
    }
    %c0 = arith.constant 0 : index
    %c0_1 = arith.constant 0 : index
    %3 = vector.load %arg3[%c0, %c0_1] : memref<8x128xf32, #tpu.memory_space<vmem>>, vector<8x128xf32>
    %c0_2 = arith.constant 0 : index
    %c0_3 = arith.constant 0 : index
    %4 = vector.load %arg5[%c0_2, %c0_3] : memref<8x128xf32, #tpu.memory_space<vmem>>, vector<8x128xf32>
    %5 = arith.mulf %3, %3 : vector<8x128xf32>
    %6 = arith.addf %4, %5 : vector<8x128xf32>
    %c0_4 = arith.constant 0 : index
    %c0_5 = arith.constant 0 : index
    %7 = vector.load %arg5[%c0_4, %c0_5] : memref<8x128xf32, #tpu.memory_space<vmem>>, vector<8x128xf32>
    tpu.vector_store %arg5[%c0_4, %c0_5], %6 {strides = array<i32>} : memref<8x128xf32, #tpu.memory_space<vmem>>, vector<8x128xf32>,
    %c0_i32_6 = arith.constant 0 : i32
    %8 = arith.cmpi eq, %arg0, %c0_i32_6 : i32
    %9 = arith.extui %8 : i1 to i32
    %c0_i32_7 = arith.constant 0 : i32
    %10 = arith.cmpi ne, %9, %c0_i32_7 : i32
    scf.if %10 {
      %c0_8 = arith.constant 0 : index
      %c0_9 = arith.constant 0 : index
      %11 = vector.load %arg1[%c0_8, %c0_9] : memref<8x128xf32, #tpu.memory_space<vmem>>, vector<8x128xf32>
      %c0_10 = arith.constant 0 : index
      %c0_11 = arith.constant 0 : index
      %12 = vector.load %arg2[%c0_10, %c0_11] : memref<8x128xf32, #tpu.memory_space<vmem>>, vector<8x128xf32>
      %13 = arith.mulf %11, %12 : vector<8x128xf32>
      %cst = arith.constant 5.000000e-01 : f32
      %14 = vector.broadcast %cst : f32 to vector<8x128xf32>
      %15 = arith.mulf %14, %13 : vector<8x128xf32>
      %16 = math.tanh %15 : vector<8x128xf32>
      %cst_12 = arith.constant 1.000000e+00 : f32
      %17 = vector.broadcast %cst_12 : f32 to vector<8x128xf32>
      %18 = arith.subf %17, %16 : vector<8x128xf32>
      %cst_13 = arith.constant 5.000000e-01 : f32
      %19 = vector.broadcast %cst_13 : f32 to vector<8x128xf32>
      %20 = arith.mulf %19, %18 : vector<8x128xf32>
      %21 = tpu.iota {dimensions = array<i32: 0>} : vector<8x128xi32>
      %c128_i32 = arith.constant 128 : i32
      %22 = vector.broadcast %c128_i32 : i32 to vector<8x128xi32>
      %23 = arith.muli %21, %22 : vector<8x128xi32>
      %24 = tpu.iota {dimensions = array<i32: 1>} : vector<8x128xi32>
      %25 = arith.addi %23, %24 : vector<8x128xi32>
      %c16_i32 = arith.constant 16 : i32
      %26 = vector.broadcast %c16_i32 : i32 to vector<8x128xi32>
      %27 = arith.cmpi slt, %25, %26 : vector<8x128xi32>
      %cst_14 = arith.constant 0.000000e+00 : f32
      %28 = vector.broadcast %cst_14 : f32 to vector<8x128xf32>
      %29 = arith.select %27, %20, %28 : vector<8x128xi1>, vector<8x128xf32>
      %30 = vector.shape_cast %29 : vector<8x128xf32> to vector<1x8x128xf32>
      %cst_15 = arith.constant dense<0.000000e+00> : vector<1xf32>
      %31 = vector.multi_reduction <add>, %30, %cst_15 [1, 2] : vector<1x8x128xf32> to vector<1xf32>
      %32 = vector.shape_cast %31 : vector<1xf32> to vector<1x1x1xf32>
      %33 = vector.extract %32[0, 0, 0] : f32 from vector<1x1x1xf32>
      %cst_16 = arith.constant 6.250000e-02 : f32
      %34 = arith.mulf %33, %cst_16 : f32
      %c0_17 = arith.constant 0 : index
      %c0_18 = arith.constant 0 : index
      %35 = vector.load %arg5[%c0_17, %c0_18] : memref<8x128xf32, #tpu.memory_space<vmem>>, vector<8x128xf32>
      %36 = vector.shape_cast %35 : vector<8x128xf32> to vector<1x8x128xf32>
      %cst_19 = arith.constant dense<0.000000e+00> : vector<1xf32>
      %37 = vector.multi_reduction <add>, %36, %cst_19 [1, 2] : vector<1x8x128xf32> to vector<1xf32>
      %38 = vector.shape_cast %37 : vector<1xf32> to vector<1x1x1xf32>
      %39 = vector.extract %38[0, 0, 0] : f32 from vector<1x1x1xf32>
      %cst_20 = arith.constant 5.000000e-04 : f32
      %40 = arith.mulf %cst_20, %39 : f32
      %41 = arith.addf %34, %40 : f32
      %c0_21 = arith.constant 0 : index
      %c0_22 = arith.constant 0 : index
      %42 = memref.load %arg4[%c0_21, %c0_22] : memref<1x1xf32, #tpu.memory_space<smem>>
      memref.store %41, %arg4[%c0_21, %c0_22] : memref<1x1xf32, #tpu.memory_space<smem>>
    } else {
    }
    return
  }
  func.func @transform_0(%arg0: i32) -> (i32, i32) {
    %c0_i32 = arith.constant 0 : i32
    %c0_i32_0 = arith.constant 0 : i32
    %c0_i32_1 = arith.constant 0 : i32
    return %c0_i32, %c0_i32_0 : i32, i32
  }
  func.func @transform_1(%arg0: i32) -> (i32, i32) {
    %c0_i32 = arith.constant 0 : i32
    %c0_i32_0 = arith.constant 0 : i32
    %c0_i32_1 = arith.constant 0 : i32
    return %c0_i32, %c0_i32_0 : i32, i32
  }
  func.func @transform_2(%arg0: i32) -> (i32, i32) {
    %c0_i32 = arith.constant 0 : i32
    %c0_i32_0 = arith.constant 0 : i32
    return %arg0, %c0_i32 : i32, i32
  }
  func.func @transform_3(%arg0: i32) -> (i32, i32) {
    %c0_i32 = arith.constant 0 : i32
    %c0_i32_0 = arith.constant 0 : i32
    %c0_i32_1 = arith.constant 0 : i32
    return %c0_i32, %c0_i32_0 : i32, i32
  }
}

</mosaic_0001>

<llo_original>
// kernel: tpu_custom_call.1
$region0: #{tpu_custom_call.1}
  #allocation0 [shape = 'u32[]', space=smem, size = 0x4, offset = 0x4, fixed_abs, tag = 'smem constant byte address 0x4 - core index']
  #allocation1 [shape = 'u32[144,128]{1,0:T(1,128)}', space=vmem, size = 0x12000, scoped, tag = 'internal scratch']
  #allocation2 [shape = 'f32[8,128]{1,0:T(8,128)}', space=vmem, size = 0x1000, scoped, tag = 'scratch operand']
  %s0 = inlined_call_operand.hbm [shape: f32[8,128], index: 0, kind: input, shape index: {}]
  %s1 = inlined_call_operand.hbm [shape: f32[8,128], index: 1, kind: input, shape index: {}]
  %s2 = inlined_call_operand.hbm [shape: f32[8,128], index: 2, kind: input, shape index: {}]
  %s3 = inlined_call_operand.hbm [shape: f32[1,1], index: 3, kind: output, shape index: {}]
  %s4 = sld [smem:[#allocation0]]
  $region42: #{tpu_custom_call.1} parent=0
    _
  %s6 = ssub.s32 1, %s4
  %s7 = scalar_select 0, %s6, %s4
  $region1: #{tpu_custom_call.1} parent=0
    #allocation3 [shape = 'u8[4096]{0}', space=vmem, size = 0x1000, scoped, tag = 'input window, operand 0, single buffered']
    #allocation4 [shape = 's32[1]{0}', space=sflag, size = 0x4, scoped, tag = 'scoped memory for tpu_custom_call.1']
    #allocation5 [shape = 's32[1]{0}', space=sflag, size = 0x4, scoped, tag = 'scoped memory for tpu_custom_call.1']
    #allocation6 [shape = 'u8[4096]{0}', space=vmem, size = 0x1000, scoped, tag = 'input window, operand 1, single buffered']
    #allocation7 [shape = 's32[1]{0}', space=sflag, size = 0x4, scoped, tag = 'scoped memory for tpu_custom_call.1']
    #allocation8 [shape = 'u8[4096]{0}', space=vmem, size = 0x1000, scoped, tag = 'input window, operand 2, single buffered']
    #allocation9 [shape = 'u8[512]{0}', space=smem, size = 0x200, scoped, tag = 'output window, operand 0, single buffered']
    %8 = vsyncpa [#allocation4], 0
    %9 = vsyncpa [#allocation7], 0
    %10 = vsyncpa [#allocation5], 0
    // Predicated region
    $region2: #{tpu_custom_call.1} parent=1 // pred_check
      _
    $region3: #{tpu_custom_call.1} parent=1 // pred_check_branch
      %12 = sbr.rel (0) target = $region5
    $region4: #{tpu_custom_call.1} parent=1 // pred_region
      %s14 = ssub.s32 128, 128
      %15 = vsyncadd [#allocation4], %s14
      %s17 = sshll.u32 [#allocation3], 4
      %s18 = int_to_ptr.vmem [resolvable:$true] %s17
      %20 = dma.hbm_to_vmem [thread:$0]  %s0, 128, %s18, [#allocation4]
    $region5: #{tpu_custom_call.1} parent=1 // pred_fallthru
      _
    // Predicated region
    $region6: #{tpu_custom_call.1} parent=1 // pred_check
      _
    $region7: #{tpu_custom_call.1} parent=1 // pred_check_branch
      %22 = sbr.rel (0) target = $region9
    $region8: #{tpu_custom_call.1} parent=1 // pred_region
      %s24 = ssub.s32 128, 128
      %25 = vsyncadd [#allocation7], %s24
      %s27 = sshll.u32 [#allocation6], 4
      %s28 = int_to_ptr.vmem [resolvable:$true] %s27
      %30 = dma.hbm_to_vmem [thread:$0]  %s1, 128, %s28, [#allocation7]
    $region9: #{tpu_custom_call.1} parent=1 // pred_fallthru
      _
    // Predicated region
    $region10: #{tpu_custom_call.1} parent=1 // pred_check
      _
    $region11: #{tpu_custom_call.1} parent=1 // pred_check_branch
      %32 = sbr.rel (0) target = $region13
    $region12: #{tpu_custom_call.1} parent=1 // pred_region
      %s34 = ssub.s32 128, 128
      %35 = vsyncadd [#allocation7], %s34
      %s37 = sshll.u32 [#allocation8], 4
      %s38 = int_to_ptr.vmem [resolvable:$true] %s37
      %40 = dma.hbm_to_vmem [thread:$0]  %s2, 128, %s38, [#allocation7]
    $region13: #{tpu_custom_call.1} parent=1 // pred_fallthru
      _
    // Predicated region
    $region14: #{tpu_custom_call.1} parent=1 // pred_check
      _
    $region15: #{tpu_custom_call.1} parent=1 // pred_check_branch
      %42 = sbr.rel (0) target = $region17
    $region16: #{tpu_custom_call.1} parent=1 // pred_region
      %43 = dma.done [#allocation4], 128
    $region17: #{tpu_custom_call.1} parent=1 // pred_fallthru
      _
    // Predicated region
    $region18: #{tpu_custom_call.1} parent=1 // pred_check
      _
    $region19: #{tpu_custom_call.1} parent=1 // pred_check_branch
      %45 = sbr.rel (0) target = $region21
    $region20: #{tpu_custom_call.1} parent=1 // pred_region
      %46 = dma.done [#allocation7], 128
    $region21: #{tpu_custom_call.1} parent=1 // pred_fallthru
      _
    // Predicated region
    $region22: #{tpu_custom_call.1} parent=1 // pred_check
      _
    $region23: #{tpu_custom_call.1} parent=1 // pred_check_branch
      %48 = sbr.rel (0) target = $region25
    $region24: #{tpu_custom_call.1} parent=1 // pred_region
      %49 = dma.done [#allocation7], 128
    $region25: #{tpu_custom_call.1} parent=1 // pred_fallthru
      _
    %p50 = scmp.eq.s32.totalorder 0, 0
    // Predicated region
    $region26: #{tpu_custom_call.1} parent=1 // pred_check
      %p51 = pneg %p50
    $region27: #{tpu_custom_call.1} parent=1 // pred_check_branch
      %53 = sbr.rel (%p51) target = $region29
    $region28: #{tpu_custom_call.1} parent=1 // pred_region
      %54 = vst [vmem:[#allocation2] sm:$0xff] 0.0
    $region29: #{tpu_custom_call.1} parent=1 // pred_fallthru
      _
    %v55 = vld [vmem:[#allocation8] sm:$0xff]
    %v56 = vld [vmem:[#allocation2] sm:$0xff]
    %v57 = vmul.f32 %v55, %v55
    %v58 = vadd.f32 %v56, %v57
    %59 = vst [vmem:[#allocation2] sm:$0xff] %v58
    // Predicated region
    $region30: #{tpu_custom_call.1} parent=1 // pred_check
      %p60 = pneg %p50
    $region31: #{tpu_custom_call.1} parent=1 // pred_check_branch
      %62 = sbr.rel (%p60) target = $region33
    $region32: #{tpu_custom_call.1} parent=1 // pred_region
      %v63 = vld [vmem:[#allocation3] sm:$0xff]
      %v64 = vld [vmem:[#allocation6] sm:$0xff]
      %v65 = vmul.f32 %v63, %v64
      %v66 = vmul.f32 %v65, 0.5
      %v67 = vtanh.pop %v66
      %v68 = vsub.f32 1.0, %v67
      %v69 = vmul.f32 %v68, 0.5
      %v70 = vlaneseq
      %v71 = vshrl.u32 %v70, 7
      %v72 = vmul.u32 %v71, 128
      %v73 = vlaneseq
      %v74 = vand.u32 %v73, 127
      %v75 = vadd.s32 %v72, %v74
      %vm76 = vcmp.lt.s32.totalorder %v75, 16
      %v77 = vsel %vm76, %v69, 0.0
      %78 = vadd.xlane.f32.xlu0 %v77
      %v79 = vpop.xlane.xlu0 %78
      %v80 = vrot.slane %v79, 4
      %v81 = vadd.f32 %v79, %v80
      %v82 = vrot.slane %v81, 2
      %v83 = vadd.f32 %v81, %v82
      %v84 = vrot.slane %v83, 1
      %v85 = vadd.f32 %v83, %v84
      %s86 = vtos %v85
      %s87 = smul.f32 %s86, 0.0625
      %v88 = vld [vmem:[#allocation2] sm:$0xff]
      %89 = vadd.xlane.f32.xlu0 %v88
      %v90 = vpop.xlane.xlu0 %89
      %v91 = vrot.slane %v90, 4
      %v92 = vadd.f32 %v90, %v91
      %v93 = vrot.slane %v92, 2
      %v94 = vadd.f32 %v92, %v93
      %v95 = vrot.slane %v94, 1
      %v96 = vadd.f32 %v94, %v95
      %s97 = vtos %v96
      %s98 = smul.f32 %s97, 0.0005
      %s99 = sadd.f32 %s87, %s98
      %s100 = scalar_lea.smem [#allocation9], 0
      %101 = sst [smem:[%s100]] %s99
    $region33: #{tpu_custom_call.1} parent=1 // pred_fallthru
      _
    // Predicated region
    $region34: #{tpu_custom_call.1} parent=1 // pred_check
      _
    $region35: #{tpu_custom_call.1} parent=1 // pred_check_branch
      %103 = sbr.rel (0) target = $region37
    $region36: #{tpu_custom_call.1} parent=1 // pred_region
      %s105 = ssub.s32 16, 16
      %106 = vsyncadd [#allocation5], %s105
      %109 = dma.smem_to_hbm [#allocation9], 16, %s3, [#allocation5]
    $region37: #{tpu_custom_call.1} parent=1 // pred_fallthru
      _
    // Predicated region
    $region38: #{tpu_custom_call.1} parent=1 // pred_check
      _
    $region39: #{tpu_custom_call.1} parent=1 // pred_check_branch
      %111 = sbr.rel (0) target = $region41
    $region40: #{tpu_custom_call.1} parent=1 // pred_region
      %112 = dma.done [#allocation5], 16
    $region41: #{tpu_custom_call.1} parent=1 // pred_fallthru
      _
    %113 = sfence
    %114 = vsyncpa [#allocation4], 1
    %115 = vsyncpa [#allocation7], 1
    %116 = vsyncpa [#allocation5], 1

</llo_original>
